<compile_context>
chip_gen: v7x
topology: tpu7x:2x2x1
jax: 0.10.0
libtpu: 0.0.40
codegen_flags: <defaults>
</compile_context>

<pallas_src>
import functools

import jax
import jax.numpy as jnp
from jax import lax
from jax.experimental import pallas as pl
from jax.experimental.pallas import tpu as pltpu

_LANES = 128
_SUBLANES = 8
_BIG = 3.4e38  # finite sentinel, used only inside min arguments


def _round_up(a, m):
    return (a + m - 1) // m * m


def _tcl_kernel(x_ref, lab_ref, ct_ref, cn_ref, out_ref,
                *, margin, batch_size, block_b):
    i = pl.program_id(0)

    x = x_ref[...]                                  # (TB, D), f32 or bf16 (streamed as-is)
    labels = lab_ref[...]                           # (TB, 1) int32
    c_norms = cn_ref[...]                           # (1, Cp) f32; _BIG for pad classes
    num_classes_p = c_norms.shape[1]

    # Offset-free squared-distance surrogate: s_j = ||c_j||^2 - 2 x.c_j
    # (||x||^2 cancels in pos + margin - neg, so it is never computed.)
    cross = jnp.dot(x, ct_ref[...], preferred_element_type=jnp.float32)  # (TB, Cp) on MXU
    s = c_norms - 2.0 * cross                                            # (TB, Cp)

    cls = lax.broadcasted_iota(jnp.int32, (1, num_classes_p), 1)         # (1, Cp)
    onehot = labels == cls                                               # (TB, Cp)

    pos = 0.5 * jnp.sum(jnp.where(onehot, s, 0.0), axis=1, keepdims=True)    # (TB, 1)
    neg = 0.5 * jnp.min(jnp.where(onehot, _BIG, s), axis=1, keepdims=True)   # (TB, 1)

    contrib = jnp.maximum(pos + jnp.float32(margin) - neg, 0.0)              # (TB, 1)

    # Mask padded rows of the (possibly ragged) last tile.
    row_id = i * block_b + lax.broadcasted_iota(jnp.int32, (block_b, 1), 0)
    contrib = jnp.where(row_id < batch_size, contrib, 0.0)

    # Per-tile partial sum, written as one full lane-dense (8, 128) block.
    tile_sum = jnp.sum(contrib, axis=0, keepdims=True)                       # (1, 1)
    out_ref[...] = jnp.broadcast_to(tile_sum, out_ref.shape)


def triplet_center_loss(x, labels, centers, margin=5.0, block_b=None):
    """x: (B, D) float32/bfloat16, labels: (B,) int, centers: (C, D) float -> scalar mean loss."""
    batch, fea_dim = x.shape
    num_classes = centers.shape[0]

    # Keep x's dtype (bf16 streams at half the HBM bytes); centers math stays in f32.
    compute_dtype = x.dtype if x.dtype in (jnp.bfloat16, jnp.float32) else jnp.float32
    x = x.astype(compute_dtype)
    centers_f32 = centers.astype(jnp.float32)
    labels = labels.astype(jnp.int32)
    itemsize = jnp.dtype(compute_dtype).itemsize

    # ---- batch tile sizing ------------------------------------------------
    if block_b is None:
        target_bytes = 2 << 20                          # ~2 MiB x tile per grid step
        bb = (target_bytes // max(1, fea_dim * itemsize)) // _SUBLANES * _SUBLANES
        bb = max(_SUBLANES, min(bb, 2048))
    else:
        bb = max(_SUBLANES, _round_up(int(block_b), _SUBLANES))
    # Ensure >= 2 tiles so the "parallel" batch axis can shard across 2 TCs (v7x).
    half = max(_SUBLANES, _round_up(-(-batch // 2), _SUBLANES))
    bb = min(bb, half, _round_up(batch, _SUBLANES))
    block_b = bb

    b_pad = _round_up(batch, block_b)
    num_tiles = b_pad // block_b

    # ---- class padding (lane-dense C) --------------------------------------
    c_pad = max(_LANES, _round_up(num_classes, _LANES))
    cp = c_pad - num_classes

    centers_t = centers_f32.astype(compute_dtype).T                       # (D, C)
    c_norms = jnp.sum(centers_f32 * centers_f32, axis=1)                  # (C,)
    if cp:
        centers_t = jnp.concatenate(
            [centers_t, jnp.zeros((fea_dim, cp), centers_t.dtype)], axis=1)
        c_norms_p = jnp.concatenate(
            [c_norms, jnp.full((cp,), _BIG, jnp.float32)], axis=0)
    else:
        c_norms_p = c_norms
    c_norms_p = c_norms_p[None, :]                                        # (1, Cp)

    # ---- label-only center-to-center term, folded out of the kernel --------
    # Gram-form C x C distances (no C x C x D intermediate).
    gram = jnp.dot(centers_f32, centers_f32.T, preferred_element_type=jnp.float32)
    d2_cc = jnp.maximum(c_norms[:, None] + c_norms[None, :] - 2.0 * gram, 0.0)
    cen_pc = 0.5 * jnp.min(
        jnp.where(jnp.eye(num_classes, dtype=bool), _BIG, d2_cc), axis=1)  # (C,)
    cen_relu_pc = jax.nn.relu(jnp.float32(margin) + 2.0 - cen_pc)          # (C,)
    counts = jnp.zeros((num_classes,), jnp.float32).at[labels].add(1.0)
    cen_total = jnp.dot(counts, cen_relu_pc)                               # scalar

    # ---- batch padding -----------------------------------------------------
    pad = b_pad - batch
    if pad:
        x = jnp.concatenate([x, jnp.zeros((pad, fea_dim), x.dtype)], axis=0)
        labels_p = jnp.concatenate([labels, jnp.zeros((pad,), labels.dtype)], axis=0)
    else:
        labels_p = labels
    labels2d = labels_p[:, None]                                          # (B_pad, 1)

    # Only raise the scoped-VMEM limit if a caller forced tiles past the defaults.
    vmem_est = (2 * block_b * fea_dim * itemsize        # double-buffered x
                + 2 * fea_dim * c_pad * itemsize        # resident centers^T
                + 4 * block_b * c_pad * 4               # cross/s/onehot temporaries
                + (2 << 20))                            # slack
    vmem_limit = min(_round_up(vmem_est, 1 << 20), 32 << 20) if vmem_est > (14 << 20) else None

    kernel = functools.partial(_tcl_kernel, margin=float(margin),
                               batch_size=batch, block_b=block_b)

    partials = pl.pallas_call(
        kernel,
        out_shape=jax.ShapeDtypeStruct((num_tiles * _SUBLANES, _LANES), jnp.float32),
        grid_spec=pltpu.PrefetchScalarGridSpec(
            num_scalar_prefetch=0,
            grid=(num_tiles,),
            in_specs=[
                pl.BlockSpec((block_b, fea_dim), lambda i: (i, 0)),       # x tile (streamed)
                pl.BlockSpec((block_b, 1), lambda i: (i, 0)),             # labels tile
                pl.BlockSpec((fea_dim, c_pad), lambda i: (0, 0)),         # centers^T (resident)
                pl.BlockSpec((1, c_pad), lambda i: (0, 0)),               # ||c||^2 (resident)
            ],
            out_specs=pl.BlockSpec((_SUBLANES, _LANES), lambda i: (i, 0)),
        ),
        compiler_params=pltpu.CompilerParams(
            dimension_semantics=("parallel",),
            vmem_limit_bytes=vmem_limit),
    )(x, labels2d, centers_t, c_norms_p)

    tile_sums = partials.reshape(num_tiles, _SUBLANES, _LANES)[:, 0, 0]
    return (jnp.sum(tile_sums) + cen_total) / jnp.float32(batch)


def _reference_loss(x, labels, centers, margin):
    # Pure-JAX reference matching the PyTorch loop semantics (sum / batch).
    num_classes = centers.shape[0]
    x = x.astype(jnp.float32)
    centers = centers.astype(jnp.float32)
    d2_xc = jnp.sum((x[:, None, :] - centers[None, :, :]) ** 2, axis=-1)        # (B, C)
    d2_cc = jnp.sum((centers[:, None, :] - centers[None, :, :]) ** 2, axis=-1)  # (C, C)
    onehot = labels[:, None] == jnp.arange(num_classes)[None, :]
    pos = jnp.sum(jnp.where(onehot, d2_xc, 0.0), axis=1) / 2.0
    neg = jnp.min(jnp.where(onehot, jnp.inf, d2_xc), axis=1) / 2.0
    cen_pc = jnp.min(jnp.where(jnp.eye(num_classes, dtype=bool), jnp.inf, d2_cc), axis=1) / 2.0
    cen = cen_pc[labels]
    per = jax.nn.relu(pos + margin - neg) + jax.nn.relu(margin + 2.0 - cen)
    return jnp.mean(per)


if __name__ == "__main__":
    num_classes = 21
    fea_dim = 128      # small stand-in for the module's default 512
    margin = 5.0

    key = jax.random.PRNGKey(0)
    k_centers, k_x, k_lab = jax.random.split(key, 3)

    # deterministic "parameter" init mirroring torch.randn(num_classes, fea_dim)
    centers = jax.random.normal(k_centers, (num_classes, fea_dim), dtype=jnp.float32)

    # Config 1: multi-tile grid with a ragged last tile (batch not a multiple of block_b).
    batch = 100
    x = jax.random.normal(k_x, (batch, fea_dim), dtype=jnp.float32)
    labels = jax.random.randint(k_lab, (batch,), 0, num_classes, dtype=jnp.int32)
    loss = jax.block_until_ready(
        triplet_center_loss(x, labels, centers, margin=margin, block_b=64))
    ref = jax.block_until_ready(_reference_loss(x, labels, centers, margin))
    assert jnp.allclose(loss, ref, rtol=1e-4, atol=1e-3), (loss, ref)

    # Config 2: auto block_b, small batch (exercises the >=2-tile cap + row masking).
    batch2 = 24
    x2 = jax.random.normal(jax.random.fold_in(k_x, 1), (batch2, fea_dim), dtype=jnp.float32)
    labels2 = jax.random.randint(jax.random.fold_in(k_lab, 1), (batch2,), 0,
                                 num_classes, dtype=jnp.int32)
    loss2 = jax.block_until_ready(triplet_center_loss(x2, labels2, centers, margin=margin))
    ref2 = jax.block_until_ready(_reference_loss(x2, labels2, centers, margin))
    assert jnp.allclose(loss2, ref2, rtol=1e-4, atol=1e-3), (loss2, ref2)

    print("KERNEL_OK")
</pallas_src>

<mosaic_0001>
module attributes {stable_mosaic.version = 11 : i64} {
  func.func @_tcl_kernel(%arg0: i32, %arg1: memref<56x128xf32, #tpu.memory_space<vmem>>, %arg2: memref<56x1xi32, #tpu.memory_space<vmem>>, %arg3: memref<128x128xf32, #tpu.memory_space<vmem>>, %arg4: memref<1x128xf32, #tpu.memory_space<vmem>>, %arg5: memref<8x128xf32, #tpu.memory_space<vmem>>) attributes {dimension_semantics = [#tpu.dimension_semantics<parallel>], iteration_bounds = array<i64: 2>, scalar_prefetch = 0 : i64, scratch_operands = 0 : i64, tpu.core_type = #tpu.core_type<tc>, window_params = [{transform_indices = @transform_0, window_bounds = array<i64: 56, 128>}, {transform_indices = @transform_1, window_bounds = array<i64: 56, 1>}, {pipeline_mode = #tpu.pipeline_mode<synchronous>, transform_indices = @transform_2, window_bounds = array<i64: 128, 128>}, {pipeline_mode = #tpu.pipeline_mode<synchronous>, transform_indices = @transform_3, window_bounds = array<i64: 1, 128>}, {transform_indices = @transform_4, window_bounds = array<i64: 8, 128>}]} {
    %c0 = arith.constant 0 : index
    %c0_0 = arith.constant 0 : index
    %0 = vector.load %arg1[%c0, %c0_0] : memref<56x128xf32, #tpu.memory_space<vmem>>, vector<56x128xf32>
    %c0_1 = arith.constant 0 : index
    %c0_2 = arith.constant 0 : index
    %1 = vector.load %arg2[%c0_1, %c0_2] : memref<56x1xi32, #tpu.memory_space<vmem>>, vector<56x1xi32>
    %c0_3 = arith.constant 0 : index
    %c0_4 = arith.constant 0 : index
    %2 = vector.load %arg4[%c0_3, %c0_4] : memref<1x128xf32, #tpu.memory_space<vmem>>, vector<1x128xf32>
    %c0_5 = arith.constant 0 : index
    %c0_6 = arith.constant 0 : index
    %3 = vector.load %arg3[%c0_5, %c0_6] : memref<128x128xf32, #tpu.memory_space<vmem>>, vector<128x128xf32>
    %cst = arith.constant dense<0.000000e+00> : vector<56x128xf32>
    %4 = tpu.matmul %0, %3, %cst {dimension_numbers = #tpu.dot_dimension_numbers<[1], [0], [0], [1], [0, 0, 1, 1], [], []>} : vector<56x128xf32>, vector<128x128xf32>, vector<56x128xf32> -> vector<56x128xf32>
    %cst_7 = arith.constant 2.000000e+00 : f32
    %5 = vector.broadcast %cst_7 : f32 to vector<56x128xf32>
    %6 = arith.mulf %5, %4 : vector<56x128xf32>
    %7 = vector.broadcast %2 : vector<1x128xf32> to vector<56x128xf32>
    %8 = arith.subf %7, %6 : vector<56x128xf32>
    %9 = tpu.iota {dimensions = array<i32: 1>} : vector<1x128xi32>
    %10 = vector.broadcast %1 : vector<56x1xi32> to vector<56x128xi32>
    %11 = vector.broadcast %9 : vector<1x128xi32> to vector<56x128xi32>
    %12 = arith.cmpi eq, %10, %11 : vector<56x128xi32>
    %cst_8 = arith.constant 0.000000e+00 : f32
    %13 = vector.broadcast %cst_8 : f32 to vector<56x128xf32>
    %14 = arith.select %12, %8, %13 : vector<56x128xi1>, vector<56x128xf32>
    %cst_9 = arith.constant dense<0.000000e+00> : vector<56xf32>
    %15 = vector.multi_reduction <add>, %14, %cst_9 [1] : vector<56x128xf32> to vector<56xf32>
    %16 = vector.shape_cast %15 : vector<56xf32> to vector<56x1xf32>
    %cst_10 = arith.constant 5.000000e-01 : f32
    %17 = vector.broadcast %cst_10 : f32 to vector<56x1xf32>
    %18 = arith.mulf %17, %16 : vector<56x1xf32>
    %cst_11 = arith.constant 3.400000e+38 : f32
    %19 = vector.broadcast %cst_11 : f32 to vector<56x128xf32>
    %20 = arith.select %12, %19, %8 : vector<56x128xi1>, vector<56x128xf32>
    %cst_12 = arith.constant dense<0x7F800000> : vector<56xf32>
    %21 = vector.multi_reduction <minimumf>, %20, %cst_12 [1] : vector<56x128xf32> to vector<56xf32>
    %22 = vector.shape_cast %21 : vector<56xf32> to vector<56x1xf32>
    %cst_13 = arith.constant 5.000000e-01 : f32
    %23 = vector.broadcast %cst_13 : f32 to vector<56x1xf32>
    %24 = arith.mulf %23, %22 : vector<56x1xf32>
    %cst_14 = arith.constant 5.000000e+00 : f32
    %25 = vector.broadcast %cst_14 : f32 to vector<56x1xf32>
    %26 = arith.addf %18, %25 : vector<56x1xf32>
    %27 = arith.subf %26, %24 : vector<56x1xf32>
    %cst_15 = arith.constant 0.000000e+00 : f32
    %28 = vector.broadcast %cst_15 : f32 to vector<56x1xf32>
    %29 = arith.maximumf %27, %28 : vector<56x1xf32>
    %c56_i32 = arith.constant 56 : i32
    %30 = arith.muli %arg0, %c56_i32 : i32
    %31 = tpu.iota {dimensions = array<i32: 0>} : vector<56x1xi32>
    %32 = vector.broadcast %30 : i32 to vector<56x1xi32>
    %33 = arith.addi %32, %31 : vector<56x1xi32>
    %c100_i32 = arith.constant 100 : i32
    %34 = vector.broadcast %c100_i32 : i32 to vector<56x1xi32>
    %35 = arith.cmpi slt, %33, %34 : vector<56x1xi32>
    %cst_16 = arith.constant 0.000000e+00 : f32
    %36 = vector.broadcast %cst_16 : f32 to vector<56x1xf32>
    %37 = arith.select %35, %29, %36 : vector<56x1xi1>, vector<56x1xf32>
    %cst_17 = arith.constant dense<0.000000e+00> : vector<1xf32>
    %38 = vector.multi_reduction <add>, %37, %cst_17 [0] : vector<56x1xf32> to vector<1xf32>
    %39 = vector.shape_cast %38 : vector<1xf32> to vector<1x1xf32>
    %40 = vector.shape_cast %39 : vector<1x1xf32> to vector<1x1xf32>
    %41 = vector.broadcast %40 : vector<1x1xf32> to vector<8x128xf32>
    %c0_18 = arith.constant 0 : index
    %c0_19 = arith.constant 0 : index
    %42 = vector.load %arg5[%c0_18, %c0_19] : memref<8x128xf32, #tpu.memory_space<vmem>>, vector<8x128xf32>
    tpu.vector_store %arg5[%c0_18, %c0_19], %41 {strides = array<i32>} : memref<8x128xf32, #tpu.memory_space<vmem>>, vector<8x128xf32>,
    return
  }
  func.func @transform_0(%arg0: i32) -> (i32, i32) {
    %c0_i32 = arith.constant 0 : i32
    %c0_i32_0 = arith.constant 0 : i32
    return %arg0, %c0_i32 : i32, i32
  }
  func.func @transform_1(%arg0: i32) -> (i32, i32) {
    %c0_i32 = arith.constant 0 : i32
    %c0_i32_0 = arith.constant 0 : i32
    return %arg0, %c0_i32 : i32, i32
  }
  func.func @transform_2(%arg0: i32) -> (i32, i32) {
    %c0_i32 = arith.constant 0 : i32
    %c0_i32_0 = arith.constant 0 : i32
    %c0_i32_1 = arith.constant 0 : i32
    return %c0_i32, %c0_i32_0 : i32, i32
  }
  func.func @transform_3(%arg0: i32) -> (i32, i32) {
    %c0_i32 = arith.constant 0 : i32
    %c0_i32_0 = arith.constant 0 : i32
    %c0_i32_1 = arith.constant 0 : i32
    return %c0_i32, %c0_i32_0 : i32, i32
  }
  func.func @transform_4(%arg0: i32) -> (i32, i32) {
    %c0_i32 = arith.constant 0 : i32
    %c0_i32_0 = arith.constant 0 : i32
    return %arg0, %c0_i32 : i32, i32
  }
}

</mosaic_0001>

<llo_original>
// kernel: tpu_custom_call.1
$region0: #{tpu_custom_call.1}
  #allocation0 [shape = 'u32[]', space=smem, size = 0x4, offset = 0x4, fixed_abs, tag = 'smem constant byte address 0x4 - core index']
  #allocation1 [shape = 'u32[144,128]{1,0:T(1,128)}', space=vmem, size = 0x12000, scoped, tag = 'internal scratch']
  %s0 = inlined_call_operand.vmem [shape: f32[112,128], index: 0, kind: input, shape index: {}]
  %s1 = inlined_call_operand.vmem [shape: s32[112,1], index: 1, kind: input, shape index: {}]
  %s2 = inlined_call_operand.hbm [shape: f32[128,128], index: 2, kind: input, shape index: {}]
  %s3 = inlined_call_operand.vmem [shape: f32[1,128], index: 3, kind: input, shape index: {}]
  %s4 = inlined_call_operand.hbm [shape: f32[16,128], index: 4, kind: output, shape index: {}]
  %s5 = sld [smem:[#allocation0]]
  $region53: #{tpu_custom_call.1} parent=0
    _
  %s7 = ssub.s32 1, %s5
  %s8 = scalar_select 0, %s7, %s5
  $region1: #{tpu_custom_call.1} parent=0
    #allocation2 [shape = 'u8[65536]{0}', space=vmem, size = 0x10000, scoped, tag = 'input window, operand 2, single buffered']
    #allocation3 [shape = 's32[2]{0}', space=sflag, size = 0x8, scoped, tag = 'scoped memory for tpu_custom_call.1']
    #allocation4 [shape = 's32[2]{0}', space=sflag, size = 0x8, scoped, tag = 'scoped memory for tpu_custom_call.1']
    #allocation5 [shape = 'u8[8192]{0}', space=vmem, size = 0x2000, scoped, tag = 'output window, operand 0']
    %9 = vsyncpa [#allocation3], 0
    %10 = vsyncpa [#allocation4], 0
    %s11 = scalar_lea.sflag [#allocation4], 1
    %12 = vsyncpa %s11, 0
    loop: start=0, step=1, limit=4
    $region2: #{tpu_custom_call.1} parent=1 // loop_pre_header
      _
    $region3: #{tpu_custom_call.1} parent=1 // loop_header
      %s14 = sphi 0, %s18
      %p15 = scmp.ge.s32.totalorder %s14, 4
      %s24 = sphi 0, %s26
      %s27 = sphi 0, %s24
      %s28 = sphi 0, %s27
      %s44 = sphi 0, %s28
      %s50 = sphi 0, %s52
      %s53 = sphi 0, %s50
      %s54 = sphi 0, %s53
      %s70 = sphi 0, %s54
      %s74 = sphi 0, %s74
      %s76 = sphi 0, %s74
      %s77 = sphi 0, %s76
      %s91 = sphi 0, %s77
      %s95 = sphi 0, %s95
      %s97 = sphi 0, %s95
      %s98 = sphi 0, %s97
      %s112 = sphi 0, %s98
      %s118 = sphi 0, %s120
      %s121 = sphi 0, %s118
      %s122 = sphi 0, %s121
      %s138 = sphi 0, %s122
    $region4: #{tpu_custom_call.1} parent=1 // loop_header_branch
      %17 = sbr.rel (%p15) target = $region8
    $region5: #{tpu_custom_call.1} parent=1 // loop_body
      %s19 = ssub.s32 %s14, 1
      %s20 = ssub.s32 %s14, 2
      %s21 = sadd.s32 %s14, 1
      %s22 = ssub.s32 %s14, %s21
      %p23 = scmp.eq.s32.totalorder %s22, 0
      %s25 = sadd.s32 %s24, 1
      %s26 = scalar_select %p23, %s24, %s25
      %p29 = pneg %p23
      %p30 = scmp.eq.s32.totalorder %s14, 1
      %p31 = por %p29, %p30
      %p32 = scmp.ne.s32.totalorder %s24, %s27
      %p33 = scmp.eq.s32.totalorder %s14, 0
      %p34 = por %p32, %p33
      %p35 = scmp.ne.s32.totalorder %s24, %s27
      %p36 = scmp.eq.s32.totalorder %s19, 1
      %p37 = por %p35, %p36
      %p38 = scmp.ne.s32.totalorder %s27, %s28
      %p39 = scmp.eq.s32.totalorder %s19, 0
      %p40 = por %p38, %p39
      %p41 = scmp.ne.s32.totalorder %s27, %s28
      %p42 = scmp.eq.s32.totalorder %s20, 1
      %p43 = por %p41, %p42
      %p45 = scmp.ne.s32.totalorder %s28, %s44
      %p46 = scmp.eq.s32.totalorder %s20, 0
      %p47 = por %p45, %p46
      %s48 = ssub.s32 %s14, %s21
      %p49 = scmp.eq.s32.totalorder %s48, 0
      %s51 = sadd.s32 %s50, 1
      %s52 = scalar_select %p49, %s50, %s51
      %p55 = pneg %p49
      %p56 = scmp.eq.s32.totalorder %s14, 1
      %p57 = por %p55, %p56
      %p58 = scmp.ne.s32.totalorder %s50, %s53
      %p59 = scmp.eq.s32.totalorder %s14, 0
      %p60 = por %p58, %p59
      %p61 = scmp.ne.s32.totalorder %s50, %s53
      %p62 = scmp.eq.s32.totalorder %s19, 1
      %p63 = por %p61, %p62
      %p64 = scmp.ne.s32.totalorder %s53, %s54
      %p65 = scmp.eq.s32.totalorder %s19, 0
      %p66 = por %p64, %p65
      %p67 = scmp.ne.s32.totalorder %s53, %s54
      %p68 = scmp.eq.s32.totalorder %s20, 1
      %p69 = por %p67, %p68
      %p71 = scmp.ne.s32.totalorder %s54, %s70
      %p72 = scmp.eq.s32.totalorder %s20, 0
      %p73 = por %p71, %p72
      %s75 = sadd.s32 %s74, 1
      %p78 = scmp.eq.s32.totalorder %s14, 1
      %p79 = scmp.ne.s32.totalorder %s74, %s76
      %p80 = scmp.eq.s32.totalorder %s14, 0
      %p81 = por %p79, %p80
      %p82 = scmp.ne.s32.totalorder %s74, %s76
      %p83 = scmp.eq.s32.totalorder %s19, 1
      %p84 = por %p82, %p83
      %p85 = scmp.ne.s32.totalorder %s76, %s77
      %p86 = scmp.eq.s32.totalorder %s19, 0
      %p87 = por %p85, %p86
      %p88 = scmp.ne.s32.totalorder %s76, %s77
      %p89 = scmp.eq.s32.totalorder %s20, 1
      %p90 = por %p88, %p89
      %p92 = scmp.ne.s32.totalorder %s77, %s91
      %p93 = scmp.eq.s32.totalorder %s20, 0
      %p94 = por %p92, %p93
      %s96 = sadd.s32 %s95, 1
      %p99 = scmp.eq.s32.totalorder %s14, 1
      %p100 = scmp.ne.s32.totalorder %s95, %s97
      %p101 = scmp.eq.s32.totalorder %s14, 0
      %p102 = por %p100, %p101
      %p103 = scmp.ne.s32.totalorder %s95, %s97
      %p104 = scmp.eq.s32.totalorder %s19, 1
      %p105 = por %p103, %p104
      %p106 = scmp.ne.s32.totalorder %s97, %s98
      %p107 = scmp.eq.s32.totalorder %s19, 0
      %p108 = por %p106, %p107
      %p109 = scmp.ne.s32.totalorder %s97, %s98
      %p110 = scmp.eq.s32.totalorder %s20, 1
      %p111 = por %p109, %p110
      %p113 = scmp.ne.s32.totalorder %s98, %s112
      %p114 = scmp.eq.s32.totalorder %s20, 0
      %p115 = por %p113, %p114
      %s116 = ssub.s32 %s14, %s21
      %p117 = scmp.eq.s32.totalorder %s116, 0
      %s119 = sadd.s32 %s118, 1
      %s120 = scalar_select %p117, %s118, %s119
      %p123 = pneg %p117
      %p124 = scmp.eq.s32.totalorder %s14, 1
      %p125 = por %p123, %p124
      %p126 = scmp.ne.s32.totalorder %s118, %s121
      %p127 = scmp.eq.s32.totalorder %s14, 0
      %p128 = por %p126, %p127
      %p129 = scmp.ne.s32.totalorder %s118, %s121
      %p130 = scmp.eq.s32.totalorder %s19, 1
      %p131 = por %p129, %p130
      %p132 = scmp.ne.s32.totalorder %s121, %s122
      %p133 = scmp.eq.s32.totalorder %s19, 0
      %p134 = por %p132, %p133
      %p135 = scmp.ne.s32.totalorder %s121, %s122
      %p136 = scmp.eq.s32.totalorder %s20, 1
      %p137 = por %p135, %p136
      %p139 = scmp.ne.s32.totalorder %s122, %s138
      %p140 = scmp.eq.s32.totalorder %s20, 0
      %p141 = por %p139, %p140
      %p142 = scmp.le.s32.totalorder 1, %s14
      %p143 = scmp.lt.s32.totalorder %s14, 3
      %p144 = pnand %p142, %p143
      %p145 = pneg %p144
      // Predicated region
      $region9: #{tpu_custom_call.1} parent=5 // pred_check
        _
      $region10: #{tpu_custom_call.1} parent=5 // pred_check_branch
        %147 = sbr.rel (%p144) target = $region12
      $region11: #{tpu_custom_call.1} parent=5 // pred_region
        %s148 = ssub.s32 %s14, 1
        // Predicated region
        $region13: #{tpu_custom_call.1} parent=11 // pred_check
          %p149 = pneg %p87
        $region14: #{tpu_custom_call.1} parent=11 // pred_check_branch
          %151 = sbr.rel (%p149) target = $region16
        $region15: #{tpu_custom_call.1} parent=11 // pred_region
          %s153 = ssub.s32 2048, 2048
          %154 = vsyncadd [#allocation3], %s153
          %s155 = sshll.u32 [#allocation2], 4
          %s156 = int_to_ptr.vmem [resolvable:$true] %s155
          %161 = dma.hbm_to_vmem [thread:$0]  %s2, 2048, %s156, [#allocation3], 128, 128, 8
        $region16: #{tpu_custom_call.1} parent=11 // pred_fallthru
          _
        // Predicated region
        $region17: #{tpu_custom_call.1} parent=11 // pred_check
          %p162 = pneg %p108
        $region18: #{tpu_custom_call.1} parent=11 // pred_check_branch
          %164 = sbr.rel (%p162) target = $region20
        $region19: #{tpu_custom_call.1} parent=11 // pred_region
          _
        $region20: #{tpu_custom_call.1} parent=11 // pred_fallthru
          _
      $region12: #{tpu_custom_call.1} parent=5 // pred_fallthru
        _
      %p165 = scmp.lt.s32.totalorder %s14, 2
      // Predicated region
      $region21: #{tpu_custom_call.1} parent=5 // pred_check
        %p166 = pneg %p165
      $region22: #{tpu_custom_call.1} parent=5 // pred_check_branch
        %168 = sbr.rel (%p166) target = $region24
      $region23: #{tpu_custom_call.1} parent=5 // pred_region
        // Predicated region
        $region25: #{tpu_custom_call.1} parent=23 // pred_check
          %p169 = pneg %p34
        $region26: #{tpu_custom_call.1} parent=23 // pred_check_branch
          %171 = sbr.rel (%p169) target = $region28
        $region27: #{tpu_custom_call.1} parent=23 // pred_region
          %s172 = smul.u32 7, %s14
          %p173 = scmp.lt.s32.totalorder %s172, 13
          %s174 = scalar_select %p173, %s172, 13
          %s175 = smul.addr %s174, 8
          %s176 = scalar_lea.vmem %s0, %s175
          %s177 = smul.u32 7, %s14
        $region28: #{tpu_custom_call.1} parent=23 // pred_fallthru
          _
        // Predicated region
        $region29: #{tpu_custom_call.1} parent=23 // pred_check
          %p178 = pneg %p60
        $region30: #{tpu_custom_call.1} parent=23 // pred_check_branch
          %180 = sbr.rel (%p178) target = $region32
        $region31: #{tpu_custom_call.1} parent=23 // pred_region
          %s181 = smul.u32 7, %s14
          %p182 = scmp.lt.s32.totalorder %s181, 13
          %s183 = scalar_select %p182, %s181, 13
          %s184 = smul.addr %s183, 8
          %s185 = scalar_lea.vmem %s1, %s184
          %s186 = smul.u32 7, %s14
        $region32: #{tpu_custom_call.1} parent=23 // pred_fallthru
          _
      $region24: #{tpu_custom_call.1} parent=5 // pred_fallthru
        _
      %p187 = scmp.le.s32.totalorder 1, %s14
      %p188 = scmp.lt.s32.totalorder %s14, 3
      %p189 = pnand %p187, %p188
      %p190 = pneg %p189
      // Predicated region
      $region33: #{tpu_custom_call.1} parent=5 // pred_check
        _
      $region34: #{tpu_custom_call.1} parent=5 // pred_check_branch
        %192 = sbr.rel (%p189) target = $region36
      $region35: #{tpu_custom_call.1} parent=5 // pred_region
        %s193 = ssub.s32 %s14, 1
        // Predicated region
        $region37: #{tpu_custom_call.1} parent=35 // pred_check
          %p194 = pneg %p87
        $region38: #{tpu_custom_call.1} parent=35 // pred_check_branch
          %196 = sbr.rel (%p194) target = $region40
        $region39: #{tpu_custom_call.1} parent=35 // pred_region
          %197 = dma.done [#allocation3], 2048
        $region40: #{tpu_custom_call.1} parent=35 // pred_fallthru
          _
        %s198 = smul.u32 7, %s19
        %p199 = scmp.lt.s32.totalorder %s198, 13
        %s200 = scalar_select %p199, %s198, 13
        %s201 = smul.addr %s200, 8
        %s202 = scalar_lea.vmem %s0, %s201
        %p203 = pneg %p40
        %p204 = pneg %p37
        %s205 = smul.u32 7, %s19
        %p206 = scmp.lt.s32.totalorder %s205, 13
        %s207 = scalar_select %p206, %s205, 13
        %s208 = smul.addr %s207, 8
        %s209 = scalar_lea.vmem %s1, %s208
        %p210 = pneg %p66
        %p211 = pneg %p63
        %p212 = pneg %p87
        %p213 = pneg %p84
        %p214 = pneg %p108
        %p215 = pneg %p105
        %p216 = pneg %p134
        %p217 = pneg %p131
        %s218 = sand.u32 %s121, 1
        %s219 = scalar_lea.sflag [#allocation4], %s218
        %s220 = sand.u32 %s121, 1
        %s221 = smul.addr %s220, 8
        %s222 = scalar_lea.vmem [#allocation5], %s221
        %s223 = smul.u32 7, %s19
        %p224 = scmp.lt.s32.totalorder %s223, 13
        %s225 = scalar_select %p224, %s223, 13
        %s226 = smul.addr %s225, 8
        %s227 = scalar_lea.vmem %s0, %s226
        %s228 = smul.u32 7, %s19
        %s229 = smul.u32 7, %s19
        %p230 = scmp.lt.s32.totalorder %s229, 13
        %s231 = scalar_select %p230, %s229, 13
        %s232 = smul.addr %s231, 8
        %s233 = scalar_lea.vmem %s1, %s232
        %s234 = smul.u32 7, %s19
        %v235 = vld [vmem:[%s227] sm:$0xff]
        %v236 = vld [vmem:[%s227 + $0x8] sm:$0xff]
        %v237 = vld [vmem:[%s227 + $0x10] sm:$0xff]
        %v238 = vld [vmem:[%s227 + $0x18] sm:$0xff]
        %v239 = vld [vmem:[%s227 + $0x20] sm:$0xff]
        %v240 = vld [vmem:[%s227 + $0x28] sm:$0xff]
        %v241 = vld [vmem:[%s227 + $0x30] sm:$0xff]
        %v242 = vld [vmem:[%s233] sm:$0xff]
        %v243 = vld [vmem:[%s233 + $0x8] sm:$0xff]
        %v244 = vld [vmem:[%s233 + $0x10] sm:$0xff]
        %v245 = vld [vmem:[%s233 + $0x18] sm:$0xff]
        %v246 = vld [vmem:[%s233 + $0x20] sm:$0xff]
        %v247 = vld [vmem:[%s233 + $0x28] sm:$0xff]
        %v248 = vld [vmem:[%s233 + $0x30] sm:$0xff]
        %v249 = vld [vmem:[%s3] sm:$0x1]
        %v250 = vld [vmem:[#allocation2] sm:$0xff]
        %v251 = vld [vmem:[#allocation2 + $0x8] sm:$0xff]
        %v252 = vld [vmem:[#allocation2 + $0x10] sm:$0xff]
        %v253 = vld [vmem:[#allocation2 + $0x18] sm:$0xff]
        %v254 = vld [vmem:[#allocation2 + $0x20] sm:$0xff]
        %v255 = vld [vmem:[#allocation2 + $0x28] sm:$0xff]
        %v256 = vld [vmem:[#allocation2 + $0x30] sm:$0xff]
        %v257 = vld [vmem:[#allocation2 + $0x38] sm:$0xff]
        %v258 = vld [vmem:[#allocation2 + $0x40] sm:$0xff]
        %v259 = vld [vmem:[#allocation2 + $0x48] sm:$0xff]
        %v260 = vld [vmem:[#allocation2 + $0x50] sm:$0xff]
        %v261 = vld [vmem:[#allocation2 + $0x58] sm:$0xff]
        %v262 = vld [vmem:[#allocation2 + $0x60] sm:$0xff]
        %v263 = vld [vmem:[#allocation2 + $0x68] sm:$0xff]
        %v264 = vld [vmem:[#allocation2 + $0x70] sm:$0xff]
        %v265 = vld [vmem:[#allocation2 + $0x78] sm:$0xff]
        %266 = vmatprep.subr.mxu0 0.0
        %267 = vmatpush1.msra.mxu0 %v250
        %268 = vmatprep.subr.mxu0 0.0
        %269 = vmatpush1.msra.mxu0 %v251
        %270 = vmatprep.subr.mxu0 0.0
        %271 = vmatpush1.msra.mxu0 %v252
        %272 = vmatprep.subr.mxu0 0.0
        %273 = vmatpush1.msra.mxu0 %v253
        %274 = vmatprep.subr.mxu0 0.0
        %275 = vmatpush1.msra.mxu0 %v254
        %276 = vmatprep.subr.mxu0 0.0
        %277 = vmatpush1.msra.mxu0 %v255
        %278 = vmatprep.subr.mxu0 0.0
        %279 = vmatpush1.msra.mxu0 %v256
        %280 = vmatprep.subr.mxu0 0.0
        %281 = vmatpush1.msra.mxu0 %v257
        %282 = vmatprep.subr.mxu0 0.0
        %283 = vmatpush1.msra.mxu0 %v258
        %284 = vmatprep.subr.mxu0 0.0
        %285 = vmatpush1.msra.mxu0 %v259
        %286 = vmatprep.subr.mxu0 0.0
        %287 = vmatpush1.msra.mxu0 %v260
        %288 = vmatprep.subr.mxu0 0.0
        %289 = vmatpush1.msra.mxu0 %v261
        %290 = vmatprep.subr.mxu0 0.0
        %291 = vmatpush1.msra.mxu0 %v262
        %292 = vmatprep.subr.mxu0 0.0
        %293 = vmatpush1.msra.mxu0 %v263
        %294 = vmatprep.subr.mxu0 0.0
        %295 = vmatpush1.msra.mxu0 %v264
        %296 = vmatprep.subr.mxu0 0.0
        %297 = vmatpush1.msra.mxu0 %v265
        %298 = vmatprep.subr.mxu0 0.0
        %299 = vmatpush1.msra.mxu0 0.0
        %300 = vmatprep.subr.mxu0 0.0
        %301 = vmatpush1.msra.mxu0 0.0
        %302 = vmatprep.subr.mxu0 0.0
        %303 = vmatpush1.msra.mxu0 0.0
        %304 = vmatprep.subr.mxu0 0.0
        %305 = vmatpush1.msra.mxu0 0.0
        %306 = vmatprep.subr.mxu0 0.0
        %307 = vmatpush1.msra.mxu0 0.0
        %308 = vmatprep.subr.mxu0 0.0
        %309 = vmatpush1.msra.mxu0 0.0
        %310 = vmatprep.subr.mxu0 0.0
        %311 = vmatpush1.msra.mxu0 0.0
        %312 = vmatprep.subr.mxu0 0.0
        %313 = vmatpush1.msra.mxu0 0.0
        %314 = vmatprep.subr.mxu0 0.0
        %315 = vmatpush1.msra.mxu0 0.0
        %316 = vmatprep.subr.mxu0 0.0
        %317 = vmatpush1.msra.mxu0 0.0
        %318 = vmatprep.subr.mxu0 0.0
        %319 = vmatpush1.msra.mxu0 0.0
        %320 = vmatprep.subr.mxu0 0.0
        %321 = vmatpush1.msra.mxu0 0.0
        %322 = vmatprep.subr.mxu0 0.0
        %323 = vmatpush1.msra.mxu0 0.0
        %324 = vmatprep.subr.mxu0 0.0
        %325 = vmatpush1.msra.mxu0 0.0
        %326 = vmatprep.subr.mxu0 0.0
        %327 = vmatpush1.msra.mxu0 0.0
        %328 = vmatprep.subr.mxu0 0.0
        %329 = vmatpush1.msra.mxu0 0.0
        %330 = vmatprep.mubr.f32.mxu0 0.0
        %331 = vmatmul.mubr.f32.gmra.mrb[0].mxu0 %v235
        %v332 = vpop.f32.mrb[0].mxu0
        %v333 = vadd.f32 0.0, %v332
        %v334 = vpop.f32.mrb[0].mxu0
        %335 = vmatprep.mubr.f32.mxu0 0.0
        %336 = vmatmul.mubr.f32.gmra.mrb[0].mxu0 %v236
        %v337 = vpop.f32.mrb[0].mxu0
        %v338 = vadd.f32 0.0, %v337
        %v339 = vpop.f32.mrb[0].mxu0
        %340 = vmatprep.mubr.f32.mxu0 0.0
        %341 = vmatmul.mubr.f32.gmra.mrb[0].mxu0 %v237
        %v342 = vpop.f32.mrb[0].mxu0
        %v343 = vadd.f32 0.0, %v342
        %v344 = vpop.f32.mrb[0].mxu0
        %345 = vmatprep.mubr.f32.mxu0 0.0
        %346 = vmatmul.mubr.f32.gmra.mrb[0].mxu0 %v238
        %v347 = vpop.f32.mrb[0].mxu0
        %v348 = vadd.f32 0.0, %v347
        %v349 = vpop.f32.mrb[0].mxu0
        %350 = vmatprep.mubr.f32.mxu0 0.0
        %351 = vmatmul.mubr.f32.gmra.mrb[0].mxu0 %v239
        %v352 = vpop.f32.mrb[0].mxu0
        %v353 = vadd.f32 0.0, %v352
        %v354 = vpop.f32.mrb[0].mxu0
        %355 = vmatprep.mubr.f32.mxu0 0.0
        %356 = vmatmul.mubr.f32.gmra.mrb[0].mxu0 %v240
        %v357 = vpop.f32.mrb[0].mxu0
        %v358 = vadd.f32 0.0, %v357
        %v359 = vpop.f32.mrb[0].mxu0
        %360 = vmatprep.mubr.f32.mxu0 0.0
        %361 = vmatmul.mubr.f32.gmra.mrb[0].mxu0 %v241
        %v362 = vpop.f32.mrb[0].mxu0
        %v363 = vadd.f32 0.0, %v362
        %v364 = vpop.f32.mrb[0].mxu0
        %365 = vdwg.mxu0
        %v366 = vmul.f32 %v333, 2.0
        %v367 = vmul.f32 %v338, 2.0
        %v368 = vmul.f32 %v343, 2.0
        %v369 = vmul.f32 %v348, 2.0
        %v370 = vmul.f32 %v353, 2.0
        %v371 = vmul.f32 %v358, 2.0
        %v372 = vmul.f32 %v363, 2.0
        %v374 = vlaneseq
        %v375 = vshrl.u32 %v374, 7
        %v376 = vsub.s32 0, %v375
        %v377 = vrot.slane %v249, %v376
        %v379 = vsub.f32 %v377, %v366
        %v380 = vsub.f32 %v377, %v367
        %v381 = vsub.f32 %v377, %v368
        %v382 = vsub.f32 %v377, %v369
        %v383 = vsub.f32 %v377, %v370
        %v384 = vsub.f32 %v377, %v371
        %v385 = vsub.f32 %v377, %v372
        %v386 = vlaneseq
        %v387 = vand.u32 %v386, 127
        %388 = vset.pattern.permute.xlu0 0
        %389 = vperm.xlu0 %388, %v242
        %v390 = vpop.permute.xlu0 %389
        %391 = vset.pattern.permute.xlu0 0
        %392 = vperm.xlu0 %391, %v243
        %v393 = vpop.permute.xlu0 %392
        %394 = vset.pattern.permute.xlu0 0
        %395 = vperm.xlu0 %394, %v244
        %v396 = vpop.permute.xlu0 %395
        %397 = vset.pattern.permute.xlu0 0
        %398 = vperm.xlu0 %397, %v245
        %v399 = vpop.permute.xlu0 %398
        %400 = vset.pattern.permute.xlu0 0
        %401 = vperm.xlu0 %400, %v246
        %v402 = vpop.permute.xlu0 %401
        %403 = vset.pattern.permute.xlu0 0
        %404 = vperm.xlu0 %403, %v247
        %v405 = vpop.permute.xlu0 %404
        %406 = vset.pattern.permute.xlu0 0
        %407 = vperm.xlu0 %406, %v248
        %v408 = vpop.permute.xlu0 %407
        %vm409 = vcmp.eq.s32.totalorder %v390, %v387
        %vm410 = vcmp.eq.s32.totalorder %v393, %v387
        %vm411 = vcmp.eq.s32.totalorder %v396, %v387
        %vm412 = vcmp.eq.s32.totalorder %v399, %v387
        %vm413 = vcmp.eq.s32.totalorder %v402, %v387
        %vm414 = vcmp.eq.s32.totalorder %v405, %v387
        %vm415 = vcmp.eq.s32.totalorder %v408, %v387
        %v416 = vsel %vm409, %v379, 0.0
        %v417 = vsel %vm410, %v380, 0.0
        %v418 = vsel %vm411, %v381, 0.0
        %v419 = vsel %vm412, %v382, 0.0
        %v420 = vsel %vm413, %v383, 0.0
        %v421 = vsel %vm414, %v384, 0.0
        %v422 = vsel %vm415, %v385, 0.0
        %423 = vadd.xlane.f32.xlu0 %v416
        %v424 = vpop.xlane.xlu0 %423
        %425 = vadd.xlane.f32.xlu0 %v417
        %v426 = vpop.xlane.xlu0 %425
        %427 = vadd.xlane.f32.xlu0 %v418
        %v428 = vpop.xlane.xlu0 %427
        %429 = vadd.xlane.f32.xlu0 %v419
        %v430 = vpop.xlane.xlu0 %429
        %431 = vadd.xlane.f32.xlu0 %v420
        %v432 = vpop.xlane.xlu0 %431
        %433 = vadd.xlane.f32.xlu0 %v421
        %v434 = vpop.xlane.xlu0 %433
        %435 = vadd.xlane.f32.xlu0 %v422
        %v436 = vpop.xlane.xlu0 %435
        %v437 = vmul.f32 %v424, 0.5
        %v438 = vmul.f32 %v426, 0.5
        %v439 = vmul.f32 %v428, 0.5
        %v440 = vmul.f32 %v430, 0.5
        %v441 = vmul.f32 %v432, 0.5
        %v442 = vmul.f32 %v434, 0.5
        %v443 = vmul.f32 %v436, 0.5
        %v444 = vsel %vm409, 3.4e+38, %v379
        %v445 = vsel %vm410, 3.4e+38, %v380
        %v446 = vsel %vm411, 3.4e+38, %v381
        %v447 = vsel %vm412, 3.4e+38, %v382
        %v448 = vsel %vm413, 3.4e+38, %v383
        %v449 = vsel %vm414, 3.4e+38, %v384
        %v450 = vsel %vm415, 3.4e+38, %v385
        %451 = vmin.xlane.f32.xlu0 %v444
        %v452 = vpop.xlane.xlu0 %451
        %453 = vmin.xlane.f32.xlu0 %v445
        %v454 = vpop.xlane.xlu0 %453
        %455 = vmin.xlane.f32.xlu0 %v446
        %v456 = vpop.xlane.xlu0 %455
        %457 = vmin.xlane.f32.xlu0 %v447
        %v458 = vpop.xlane.xlu0 %457
        %459 = vmin.xlane.f32.xlu0 %v448
        %v460 = vpop.xlane.xlu0 %459
        %461 = vmin.xlane.f32.xlu0 %v449
        %v462 = vpop.xlane.xlu0 %461
        %463 = vmin.xlane.f32.xlu0 %v450
        %v464 = vpop.xlane.xlu0 %463
        %v465 = vmul.f32 %v452, 0.5
        %v466 = vmul.f32 %v454, 0.5
        %v467 = vmul.f32 %v456, 0.5
        %v468 = vmul.f32 %v458, 0.5
        %v469 = vmul.f32 %v460, 0.5
        %v470 = vmul.f32 %v462, 0.5
        %v471 = vmul.f32 %v464, 0.5
        %v472 = vadd.f32 %v437, 5.0
        %v473 = vadd.f32 %v438, 5.0
        %v474 = vadd.f32 %v439, 5.0
        %v475 = vadd.f32 %v440, 5.0
        %v476 = vadd.f32 %v441, 5.0
        %v477 = vadd.f32 %v442, 5.0
        %v478 = vadd.f32 %v443, 5.0
        %v479 = vsub.f32 %v472, %v465
        %v480 = vsub.f32 %v473, %v466
        %v481 = vsub.f32 %v474, %v467
        %v482 = vsub.f32 %v475, %v468
        %v483 = vsub.f32 %v476, %v469
        %v484 = vsub.f32 %v477, %v470
        %v485 = vsub.f32 %v478, %v471
        %v486 = vmax.f32 %v479, 0.0
        %v487 = vmax.f32 %v480, 0.0
        %v488 = vmax.f32 %v481, 0.0
        %v489 = vmax.f32 %v482, 0.0
        %v490 = vmax.f32 %v483, 0.0
        %v491 = vmax.f32 %v484, 0.0
        %v492 = vmax.f32 %v485, 0.0
        %s493 = smul.u32 %s19, 56
        %v494 = vlaneseq
        %v495 = vshrl.u32 %v494, 7
        %v496 = vadd.s32 %v495, 8
        %v497 = vadd.s32 %v495, 16
        %v498 = vadd.s32 %v495, 24
        %v499 = vadd.s32 %v495, 32
        %v500 = vadd.s32 %v495, 40
        %v501 = vadd.s32 %v495, 48
        %v502 = vstv %s493
        %v503 = vadd.s32 %v502, %v495
        %v504 = vadd.s32 %v502, %v496
        %v505 = vadd.s32 %v502, %v497
        %v506 = vadd.s32 %v502, %v498
        %v507 = vadd.s32 %v502, %v499
        %v508 = vadd.s32 %v502, %v500
        %v509 = vadd.s32 %v502, %v501
        %vm510 = vcmp.lt.s32.totalorder %v503, 100
        %vm511 = vcmp.lt.s32.totalorder %v504, 100
        %vm512 = vcmp.lt.s32.totalorder %v505, 100
        %vm513 = vcmp.lt.s32.totalorder %v506, 100
        %vm514 = vcmp.lt.s32.totalorder %v507, 100
        %vm515 = vcmp.lt.s32.totalorder %v508, 100
        %vm516 = vcmp.lt.s32.totalorder %v509, 100
        %v517 = vsel %vm510, %v486, 0.0
        %v518 = vsel %vm511, %v487, 0.0
        %v519 = vsel %vm512, %v488, 0.0
        %v520 = vsel %vm513, %v489, 0.0
        %v521 = vsel %vm514, %v490, 0.0
        %v522 = vsel %vm515, %v491, 0.0
        %v523 = vsel %vm516, %v492, 0.0
        %v524 = vadd.f32 %v517, %v518
        %v525 = vadd.f32 %v524, %v519
        %v526 = vadd.f32 %v525, %v520
        %v527 = vadd.f32 %v526, %v521
        %v528 = vadd.f32 %v527, %v522
        %v529 = vadd.f32 %v528, %v523
        %v530 = vrot.slane %v529, 4
        %v531 = vadd.f32 %v529, %v530
        %v532 = vrot.slane %v531, 2
        %v533 = vadd.f32 %v531, %v532
        %v534 = vrot.slane %v533, 1
        %v535 = vadd.f32 %v533, %v534
        %536 = vst [vmem:[%s222] sm:$0xff] %v535
        %s537 = sand.u32 %s121, 1
        %s538 = scalar_lea.sflag [#allocation4], %s537
        %s539 = sand.u32 %s121, 1
        %s540 = smul.addr %s539, 8
        %s541 = scalar_lea.vmem [#allocation5], %s540
        // Predicated region
        $region41: #{tpu_custom_call.1} parent=35 // pred_check
          %p542 = pneg %p131
        $region42: #{tpu_custom_call.1} parent=35 // pred_check_branch
          %544 = sbr.rel (%p542) target = $region44
        $region43: #{tpu_custom_call.1} parent=35 // pred_region
          %s546 = ssub.s32 128, 128
          %547 = vsyncadd %s538, %s546
          %s548 = smul.addr %s19, 128
          %s549 = scalar_lea.hbm %s4, %s548
          %s551 = sshll.u32 %s541, 4
          %s552 = int_to_ptr.vmem [resolvable:$true] %s551
          %554 = dma.vmem_to_hbm [thread:$0]  %s552, 128, %s549, %s538
        $region44: #{tpu_custom_call.1} parent=35 // pred_fallthru
          _
      $region36: #{tpu_custom_call.1} parent=5 // pred_fallthru
        _
      %p555 = scmp.le.s32.totalorder 2, %s14
      // Predicated region
      $region45: #{tpu_custom_call.1} parent=5 // pred_check
        %p556 = pneg %p555
      $region46: #{tpu_custom_call.1} parent=5 // pred_check_branch
        %558 = sbr.rel (%p556) target = $region48
      $region47: #{tpu_custom_call.1} parent=5 // pred_region
        %s559 = ssub.s32 %s14, 2
        // Predicated region
        $region49: #{tpu_custom_call.1} parent=47 // pred_check
          %p560 = pneg %p137
        $region50: #{tpu_custom_call.1} parent=47 // pred_check_branch
          %562 = sbr.rel (%p560) target = $region52
        $region51: #{tpu_custom_call.1} parent=47 // pred_region
          %s563 = sand.u32 %s122, 1
          %s564 = scalar_lea.sflag [#allocation4], %s563
          %s565 = sand.u32 %s122, 1
          %s566 = smul.addr %s565, 8
          %s567 = scalar_lea.vmem [#allocation5], %s566
          %568 = dma.done %s564, 128
        $region52: #{tpu_custom_call.1} parent=47 // pred_fallthru
          _
      $region48: #{tpu_custom_call.1} parent=5 // pred_fallthru
        _
    $region6: #{tpu_custom_call.1} parent=1 // loop_footer
      %s18 = sadd.s32 1, %s14
    $region7: #{tpu_custom_call.1} parent=1 // loop_footer_branch
      %13 = sbr.rel target = $region3
    $region8: #{tpu_custom_call.1} parent=1 // loop_exit
      _
    %569 = vsyncpa [#allocation3], 1
    %s570 = scalar_lea.sflag [#allocation3], 1
    %571 = vsyncpa %s570, 1
    %572 = vsyncpa [#allocation4], 1
    %s573 = scalar_lea.sflag [#allocation4], 1
    %574 = vsyncpa %s573, 1

</llo_original>
